<compile_context>
chip_gen: v7x
topology: tpu7x:2x2x1
jax: 0.10.0
libtpu: 0.0.40
codegen_flags: <defaults>
</compile_context>

<pallas_src>
import jax
import jax.numpy as jnp
from jax.experimental import pallas as pl
from jax.experimental.pallas import tpu as pltpu

_LANE = 128
_SUBLANE = 8
# Per-block byte budget: 2 MiB/block => 2 arrays x 2 pipeline buffers x 2 MiB
# = 8 MiB, inside v5e's 16 MiB default scoped VMEM (and v6e/v7x's 32 MiB).
_MAX_BLOCK_BYTES = 2 * 1024 * 1024


# ----------------------------------------------------------------------------
# Pallas kernel: identity (pass-through) copy of one lane-dense block.
# ----------------------------------------------------------------------------
def _passthrough_kernel(x_ref, o_ref):
    o_ref[...] = x_ref[...]


def _lane_dense_2d(x: jax.Array):
    """Reshape an array to a lane-dense 2D slab (R, C): C is a multiple of 128
    (as wide as the block budget allows) and R is a multiple of 8 when
    possible.  Returns None if no clean 128-aligned reshape exists."""
    n = x.size
    if n == 0 or n % _LANE != 0:
        # TODO(synk): unaligned element counts would need a padded fallback.
        return None
    itemsize = jnp.dtype(x.dtype).itemsize
    c = _LANE
    while True:
        c2 = c * 2
        if n % c2 != 0:
            break
        r2 = n // c2
        if not (r2 % _SUBLANE == 0 or r2 == 1):
            break
        if c2 * itemsize > _MAX_BLOCK_BYTES:
            break
        c = c2
    return x.reshape(n // c, c)


def _pallas_passthrough(x2d: jax.Array) -> jax.Array:
    """Tiled identity copy of a lane-dense 2D array through a Pallas kernel.

    No padding / slicing: the row tile always divides R exactly (or equals R),
    and C is already a multiple of 128, so every store is a full, unmasked
    lane-dense vst.  The input buffer is donated to the output via
    input_output_aliases, so the kernel costs a single HBM read + in-place
    write of the (already-resident) buffer.
    """
    R, C = x2d.shape
    bytes_per_row = C * jnp.dtype(x2d.dtype).itemsize

    # Largest row tile (multiple of 8, dividing R) within the per-block budget;
    # for small inputs this is simply the whole array (single grid step).
    max_rows = max(1, _MAX_BLOCK_BYTES // bytes_per_row)
    tile_r = R
    if R > max_rows:
        tile_r = 0
        d = _SUBLANE
        while d <= max_rows:
            if R % d == 0:
                tile_r = d
            d += _SUBLANE
        if tile_r == 0:
            tile_r = R  # no clean divisor: fall back to one full-array block
    grid_r = R // tile_r

    return pl.pallas_call(
        _passthrough_kernel,
        out_shape=jax.ShapeDtypeStruct((R, C), x2d.dtype),
        grid_spec=pltpu.PrefetchScalarGridSpec(
            num_scalar_prefetch=0,
            grid=(grid_r,),
            in_specs=[pl.BlockSpec((tile_r, C), lambda i: (i, 0))],
            out_specs=pl.BlockSpec((tile_r, C), lambda i: (i, 0)),
        ),
        input_output_aliases={0: 0},  # output = donated input buffer
        compiler_params=pltpu.CompilerParams(
            # "parallel" lets v7x shard the (serial) tile loop across its 2 TCs.
            dimension_semantics=("parallel",),
        ),
    )(x2d)


# ----------------------------------------------------------------------------
# GoogLeNet module (JAX/Pallas mirror of the empty PyTorch stub).
# ----------------------------------------------------------------------------
class GoogLeNet:
    """Mirror of the (empty) reference GoogLeNet.

    The reference declares no parameters and its forward body is `pass`
    (returns None for any inputs).  We reproduce that exactly, routing array
    inputs through the Pallas pass-through kernel so the TPU kernel path is
    exercised, without any host syncs in the hot path.
    """

    def __init__(self):
        # Reference __init__ defines no layers; nothing to initialize.
        pass

    def forward(self, *inputs):
        for x in inputs:
            if isinstance(x, jax.Array):
                x2d = _lane_dense_2d(x)
                if x2d is not None:
                    _pallas_passthrough(x2d)  # async; no host round-trip here
        return None  # reference forward has `pass` => returns None

    __call__ = forward


# ----------------------------------------------------------------------------
# Driver.
# ----------------------------------------------------------------------------
if __name__ == "__main__":
    key = jax.random.PRNGKey(0)
    # Small NCHW input consistent with an image-classification forward.
    x = jax.random.normal(key, (2, 4, 16, 16), dtype=jnp.float32)

    model = GoogLeNet()

    # Run the Pallas kernel once directly and block on the result.
    x2d = _lane_dense_2d(x)            # (8, 256): lane-dense, no padding
    y2d = _pallas_passthrough(x2d)     # single full-array block, aliased output
    jax.block_until_ready(y2d)

    # One-time correctness check against the original (outside any hot path).
    assert bool(jnp.array_equal(y2d.reshape(x.shape), x)), "pass-through mismatch"

    # Full forward pass (matches reference semantics: returns None).
    out = model(x)
    assert out is None, "reference GoogLeNet.forward returns None"

    print("KERNEL_OK")
</pallas_src>

<mosaic_0001>
module attributes {stable_mosaic.version = 11 : i64} {
  func.func @_passthrough_kernel(%arg0: i32, %arg1: memref<8x256xf32, #tpu.memory_space<vmem>>, %arg2: memref<8x256xf32, #tpu.memory_space<vmem>>) attributes {dimension_semantics = [#tpu.dimension_semantics<parallel>], iteration_bounds = array<i64: 1>, scalar_prefetch = 0 : i64, scratch_operands = 0 : i64, tpu.core_type = #tpu.core_type<tc>, window_params = [{transform_indices = @transform_0, window_bounds = array<i64: 8, 256>}, {transform_indices = @transform_1, window_bounds = array<i64: 8, 256>}]} {
    %c0 = arith.constant 0 : index
    %c0_0 = arith.constant 0 : index
    %0 = vector.load %arg1[%c0, %c0_0] : memref<8x256xf32, #tpu.memory_space<vmem>>, vector<8x256xf32>
    %c0_1 = arith.constant 0 : index
    %c0_2 = arith.constant 0 : index
    %1 = vector.load %arg2[%c0_1, %c0_2] : memref<8x256xf32, #tpu.memory_space<vmem>>, vector<8x256xf32>
    tpu.vector_store %arg2[%c0_1, %c0_2], %0 {strides = array<i32>} : memref<8x256xf32, #tpu.memory_space<vmem>>, vector<8x256xf32>,
    return
  }
  func.func @transform_0(%arg0: i32) -> (i32, i32) {
    %c0_i32 = arith.constant 0 : i32
    %c0_i32_0 = arith.constant 0 : i32
    return %arg0, %c0_i32 : i32, i32
  }
  func.func @transform_1(%arg0: i32) -> (i32, i32) {
    %c0_i32 = arith.constant 0 : i32
    %c0_i32_0 = arith.constant 0 : i32
    return %arg0, %c0_i32 : i32, i32
  }
}

</mosaic_0001>

<llo_original>
// kernel: tpu_custom_call.1
$region0: #{tpu_custom_call.1}
  #allocation0 [shape = 'u32[]', space=smem, size = 0x4, offset = 0x4, fixed_abs, tag = 'smem constant byte address 0x4 - core index']
  #allocation1 [shape = 'u32[144,128]{1,0:T(1,128)}', space=vmem, size = 0x12000, scoped, tag = 'internal scratch']
  %s0 = inlined_call_operand.hbm [shape: f32[8,256], index: 0, kind: input, shape index: {}, may-alias: {0,1}]
  %s1 = inlined_call_operand.hbm [shape: f32[8,256], index: 1, kind: output, shape index: {}, may-alias: {0,1}]
  %s2 = sld [smem:[#allocation0]]
  $region18: #{tpu_custom_call.1} parent=0
    _
  %s4 = ssub.s32 1, %s2
  %s5 = scalar_select 0, %s4, %s2
  $region1: #{tpu_custom_call.1} parent=0
    #allocation2 [shape = 'u8[8192]{0}', space=vmem, size = 0x2000, scoped, tag = 'input window, operand 0, single buffered']
    #allocation3 [shape = 's32[1]{0}', space=sflag, size = 0x4, scoped, tag = 'scoped memory for tpu_custom_call.1']
    #allocation4 [shape = 's32[1]{0}', space=sflag, size = 0x4, scoped, tag = 'scoped memory for tpu_custom_call.1']
    #allocation5 [shape = 'u8[8192]{0}', space=vmem, size = 0x2000, scoped, tag = 'output window, operand 0, single buffered']
    %6 = vsyncpa [#allocation3], 0
    %7 = vsyncpa [#allocation4], 0
    // Predicated region
    $region2: #{tpu_custom_call.1} parent=1 // pred_check
      _
    $region3: #{tpu_custom_call.1} parent=1 // pred_check_branch
      %9 = sbr.rel (0) target = $region5
    $region4: #{tpu_custom_call.1} parent=1 // pred_region
      %s11 = ssub.s32 256, 256
      %12 = vsyncadd [#allocation3], %s11
      %s14 = sshll.u32 [#allocation2], 4
      %s15 = int_to_ptr.vmem [resolvable:$true] %s14
      %17 = dma.hbm_to_vmem [thread:$0]  %s0, 256, %s15, [#allocation3]
    $region5: #{tpu_custom_call.1} parent=1 // pred_fallthru
      _
    // Predicated region
    $region6: #{tpu_custom_call.1} parent=1 // pred_check
      _
    $region7: #{tpu_custom_call.1} parent=1 // pred_check_branch
      %19 = sbr.rel (0) target = $region9
    $region8: #{tpu_custom_call.1} parent=1 // pred_region
      %20 = dma.done [#allocation3], 256
    $region9: #{tpu_custom_call.1} parent=1 // pred_fallthru
      _
    %v21 = vld [vmem:[#allocation2] sm:$0xff]
    %v22 = vld [vmem:[#allocation2 + $0x8] sm:$0xff]
    %23 = vst [vmem:[#allocation5] sm:$0xff] %v21
    %24 = vst [vmem:[#allocation5 + $0x8] sm:$0xff] %v22
    // Predicated region
    $region10: #{tpu_custom_call.1} parent=1 // pred_check
      _
    $region11: #{tpu_custom_call.1} parent=1 // pred_check_branch
      %26 = sbr.rel (0) target = $region13
    $region12: #{tpu_custom_call.1} parent=1 // pred_region
      %s28 = ssub.s32 256, 256
      %29 = vsyncadd [#allocation4], %s28
      %s31 = sshll.u32 [#allocation5], 4
      %s32 = int_to_ptr.vmem [resolvable:$true] %s31
      %34 = dma.vmem_to_hbm [thread:$0]  %s32, 256, %s1, [#allocation4]
    $region13: #{tpu_custom_call.1} parent=1 // pred_fallthru
      _
    // Predicated region
    $region14: #{tpu_custom_call.1} parent=1 // pred_check
      _
    $region15: #{tpu_custom_call.1} parent=1 // pred_check_branch
      %36 = sbr.rel (0) target = $region17
    $region16: #{tpu_custom_call.1} parent=1 // pred_region
      %37 = dma.done [#allocation4], 256
    $region17: #{tpu_custom_call.1} parent=1 // pred_fallthru
      _
    %38 = vsyncpa [#allocation3], 1
    %39 = vsyncpa [#allocation4], 1

</llo_original>
